<compile_context>
chip_gen: v5e
topology: v5e:2x2
jax: 0.10.0
libtpu: 0.0.40
codegen_flags: <defaults>
</compile_context>

<pallas_src>
import jax
import jax.numpy as jnp
from jax.experimental import pallas as pl
from jax.experimental.pallas import tpu as pltpu


def _jsd_kernel(x1_ref, x2_ref, out_ref):
    # Cast in-kernel (VPU cast is free; keeps HBM traffic at the input dtype width).
    x1 = x1_ref[...].astype(jnp.float32)          # (TILE_N, C)
    x2 = x2_ref[...].astype(jnp.float32)          # (TILE_N, C)

    # Numerically stable log-softmax over the class (lane) axis.
    m1 = jnp.max(x1, axis=-1, keepdims=True)
    lse1 = jnp.log(jnp.sum(jnp.exp(x1 - m1), axis=-1, keepdims=True)) + m1
    lsm1 = x1 - lse1

    m2 = jnp.max(x2, axis=-1, keepdims=True)
    lse2 = jnp.log(jnp.sum(jnp.exp(x2 - m2), axis=-1, keepdims=True)) + m2
    lsm2 = x2 - lse2

    # total_m = 0.5 * (p1 + p1) == softmax(x1)  (faithful to the original module)
    tm = jnp.exp(lsm1)
    log_tm = jnp.log(tm)

    # F.kl_div(input=log_q, target=p, reduction='none') -> where(p>0, p*(log p - log_q), 0)
    kl1 = jnp.where(tm > 0, tm * (log_tm - lsm1), 0.0)
    kl2 = jnp.where(tm > 0, tm * (log_tm - lsm2), 0.0)

    loss = 0.5 * jnp.sum(kl1 + kl2, axis=-1, keepdims=True)   # (TILE_N, 1)
    out_ref[...] = loss.astype(out_ref.dtype)


def jsd(net_1_logits, net_2_logits, *, tile_n=512):
    """net_1_logits, net_2_logits: (N, C) float -> per-sample JSD loss, shape (N,) f32."""
    assert net_1_logits.shape == net_2_logits.shape
    assert net_1_logits.ndim == 2
    N, C = net_1_logits.shape
    itemsize = jnp.dtype(net_1_logits.dtype).itemsize

    # Keep the double-buffered working set well inside VMEM:
    # 2 inputs x 2 buffers at input width, plus ~8 f32-wide temporaries per row.
    c_lanes = pl.cdiv(C, 128) * 128
    per_row_bytes = 2 * 2 * c_lanes * itemsize + 8 * c_lanes * 4
    vmem_budget = 24 * 1024 * 1024
    max_rows = max(8, ((vmem_budget // per_row_bytes) // 8) * 8)
    tile_n = min(tile_n, max_rows)

    if N <= tile_n:
        # Single row-block: block dim == full array dim, so no (8,128) alignment needed.
        tile_n = N
    grid_n = pl.cdiv(N, tile_n)

    cost = pl.CostEstimate(
        flops=int(20 * N * C),
        transcendentals=int(4 * N * C),
        bytes_accessed=int(2 * N * C * itemsize + N * 4),
    )

    out = pl.pallas_call(
        _jsd_kernel,
        out_shape=jax.ShapeDtypeStruct((N, 1), jnp.float32),
        grid=(grid_n,),
        in_specs=[
            pl.BlockSpec((tile_n, C), lambda i: (i, 0)),
            pl.BlockSpec((tile_n, C), lambda i: (i, 0)),
        ],
        out_specs=pl.BlockSpec((tile_n, 1), lambda i: (i, 0)),
        compiler_params=pltpu.CompilerParams(
            dimension_semantics=("parallel",),
            vmem_limit_bytes=64 * 1024 * 1024,
        ),
        cost_estimate=cost,
    )(net_1_logits, net_2_logits)
    return out[:, 0]


if __name__ == "__main__":
    key = jax.random.PRNGKey(0)
    k1, k2 = jax.random.split(key)
    batch, channels = 2, 4
    net_1_logits = jax.random.normal(k1, (batch, channels), dtype=jnp.float32)
    net_2_logits = jax.random.normal(k2, (batch, channels), dtype=jnp.float32)

    loss = jsd(net_1_logits, net_2_logits)
    jax.block_until_ready(loss)

    # Plain-JAX reference replicating the PyTorch module verbatim.
    p1 = jax.nn.softmax(net_1_logits, axis=1)
    tm = 0.5 * (p1 + p1)
    lsm1 = jax.nn.log_softmax(net_1_logits, axis=1)
    lsm2 = jax.nn.log_softmax(net_2_logits, axis=1)
    ref = 0.5 * jnp.sum(tm * (jnp.log(tm) - lsm1) + tm * (jnp.log(tm) - lsm2), axis=1)

    assert loss.shape == (batch,)
    assert jnp.allclose(loss, ref, atol=1e-5, rtol=1e-5), (loss, ref)
    print("KERNEL_OK")
</pallas_src>

<mosaic_0001>
module attributes {stable_mosaic.version = 11 : i64} {
  func.func @_jsd_kernel(%arg0: i32, %arg1: memref<2x4xf32, #tpu.memory_space<vmem>>, %arg2: memref<2x4xf32, #tpu.memory_space<vmem>>, %arg3: memref<2x1xf32, #tpu.memory_space<vmem>>) attributes {dimension_semantics = [#tpu.dimension_semantics<parallel>], iteration_bounds = array<i64: 1>, scalar_prefetch = 0 : i64, scratch_operands = 0 : i64, tpu.core_type = #tpu.core_type<tc>, window_params = [{transform_indices = @transform_0, window_bounds = array<i64: 2, 4>}, {transform_indices = @transform_1, window_bounds = array<i64: 2, 4>}, {transform_indices = @transform_2, window_bounds = array<i64: 2, 1>}]} {
    %c0 = arith.constant 0 : index
    %c0_0 = arith.constant 0 : index
    %0 = vector.load %arg1[%c0, %c0_0] : memref<2x4xf32, #tpu.memory_space<vmem>>, vector<2x4xf32>
    %c0_1 = arith.constant 0 : index
    %c0_2 = arith.constant 0 : index
    %1 = vector.load %arg2[%c0_1, %c0_2] : memref<2x4xf32, #tpu.memory_space<vmem>>, vector<2x4xf32>
    %cst = arith.constant dense<0xFF800000> : vector<2xf32>
    %2 = vector.multi_reduction <maximumf>, %0, %cst [1] : vector<2x4xf32> to vector<2xf32>
    %3 = vector.shape_cast %2 : vector<2xf32> to vector<2x1xf32>
    %4 = vector.broadcast %3 : vector<2x1xf32> to vector<2x4xf32>
    %5 = arith.subf %0, %4 : vector<2x4xf32>
    %6 = math.exp %5 : vector<2x4xf32>
    %cst_3 = arith.constant dense<0.000000e+00> : vector<2xf32>
    %7 = vector.multi_reduction <add>, %6, %cst_3 [1] : vector<2x4xf32> to vector<2xf32>
    %8 = vector.shape_cast %7 : vector<2xf32> to vector<2x1xf32>
    %9 = math.log %8 : vector<2x1xf32>
    %10 = arith.addf %9, %3 : vector<2x1xf32>
    %11 = vector.broadcast %10 : vector<2x1xf32> to vector<2x4xf32>
    %12 = arith.subf %0, %11 : vector<2x4xf32>
    %cst_4 = arith.constant dense<0xFF800000> : vector<2xf32>
    %13 = vector.multi_reduction <maximumf>, %1, %cst_4 [1] : vector<2x4xf32> to vector<2xf32>
    %14 = vector.shape_cast %13 : vector<2xf32> to vector<2x1xf32>
    %15 = vector.broadcast %14 : vector<2x1xf32> to vector<2x4xf32>
    %16 = arith.subf %1, %15 : vector<2x4xf32>
    %17 = math.exp %16 : vector<2x4xf32>
    %cst_5 = arith.constant dense<0.000000e+00> : vector<2xf32>
    %18 = vector.multi_reduction <add>, %17, %cst_5 [1] : vector<2x4xf32> to vector<2xf32>
    %19 = vector.shape_cast %18 : vector<2xf32> to vector<2x1xf32>
    %20 = math.log %19 : vector<2x1xf32>
    %21 = arith.addf %20, %14 : vector<2x1xf32>
    %22 = vector.broadcast %21 : vector<2x1xf32> to vector<2x4xf32>
    %23 = arith.subf %1, %22 : vector<2x4xf32>
    %24 = math.exp %12 : vector<2x4xf32>
    %25 = math.log %24 : vector<2x4xf32>
    %cst_6 = arith.constant 0.000000e+00 : f32
    %26 = vector.broadcast %cst_6 : f32 to vector<2x4xf32>
    %27 = arith.cmpf ogt, %24, %26 : vector<2x4xf32>
    %28 = arith.subf %25, %12 : vector<2x4xf32>
    %29 = arith.mulf %24, %28 : vector<2x4xf32>
    %cst_7 = arith.constant 0.000000e+00 : f32
    %30 = vector.broadcast %cst_7 : f32 to vector<2x4xf32>
    %31 = arith.select %27, %29, %30 : vector<2x4xi1>, vector<2x4xf32>
    %cst_8 = arith.constant 0.000000e+00 : f32
    %32 = vector.broadcast %cst_8 : f32 to vector<2x4xf32>
    %33 = arith.cmpf ogt, %24, %32 : vector<2x4xf32>
    %34 = arith.subf %25, %23 : vector<2x4xf32>
    %35 = arith.mulf %24, %34 : vector<2x4xf32>
    %cst_9 = arith.constant 0.000000e+00 : f32
    %36 = vector.broadcast %cst_9 : f32 to vector<2x4xf32>
    %37 = arith.select %33, %35, %36 : vector<2x4xi1>, vector<2x4xf32>
    %38 = arith.addf %31, %37 : vector<2x4xf32>
    %cst_10 = arith.constant dense<0.000000e+00> : vector<2xf32>
    %39 = vector.multi_reduction <add>, %38, %cst_10 [1] : vector<2x4xf32> to vector<2xf32>
    %40 = vector.shape_cast %39 : vector<2xf32> to vector<2x1xf32>
    %cst_11 = arith.constant 5.000000e-01 : f32
    %41 = vector.broadcast %cst_11 : f32 to vector<2x1xf32>
    %42 = arith.mulf %41, %40 : vector<2x1xf32>
    %c0_12 = arith.constant 0 : index
    %c0_13 = arith.constant 0 : index
    %43 = vector.load %arg3[%c0_12, %c0_13] : memref<2x1xf32, #tpu.memory_space<vmem>>, vector<2x1xf32>
    tpu.vector_store %arg3[%c0_12, %c0_13], %42 {strides = array<i32>} : memref<2x1xf32, #tpu.memory_space<vmem>>, vector<2x1xf32>,
    return
  }
  func.func @transform_0(%arg0: i32) -> (i32, i32) {
    %c0_i32 = arith.constant 0 : i32
    %c0_i32_0 = arith.constant 0 : i32
    return %arg0, %c0_i32 : i32, i32
  }
  func.func @transform_1(%arg0: i32) -> (i32, i32) {
    %c0_i32 = arith.constant 0 : i32
    %c0_i32_0 = arith.constant 0 : i32
    return %arg0, %c0_i32 : i32, i32
  }
  func.func @transform_2(%arg0: i32) -> (i32, i32) {
    %c0_i32 = arith.constant 0 : i32
    %c0_i32_0 = arith.constant 0 : i32
    return %arg0, %c0_i32 : i32, i32
  }
}

</mosaic_0001>

<llo_original>
// kernel: tpu_custom_call.1
$region0: #{tpu_custom_call.1}
  #allocation0 [shape = 'u32[]', space=smem, size = 0x4, offset = 0x4, fixed_abs, tag = 'smem constant byte address 0x4 - core index']
  #allocation1 [shape = 'u32[72,128]{1,0:T(1,128)}', space=vmem, size = 0x9000, scoped, tag = 'internal scratch']
  %s0 = inlined_call_operand.hbm [shape: f32[2,4], index: 0, kind: input, shape index: {}]
  %s1 = inlined_call_operand.hbm [shape: f32[2,4], index: 1, kind: input, shape index: {}]
  %s2 = inlined_call_operand.vmem [shape: f32[2,1], index: 2, kind: output, shape index: {}]
  %s3 = sld [smem:[#allocation0]]
  $region26: #{tpu_custom_call.1} parent=0
    _
  %s5 = ssub.s32 1, %s3
  %s6 = scalar_select 0, %s5, %s3
  $region1: #{tpu_custom_call.1} parent=0
    #allocation2 [shape = 'u8[1024]{0}', space=vmem, size = 0x400, scoped, tag = 'input window, operand 0, single buffered']
    #allocation3 [shape = 's32[1]{0}', space=sflag, size = 0x4, scoped, tag = 'scoped memory for tpu_custom_call.1']
    #allocation4 [shape = 'u8[1024]{0}', space=vmem, size = 0x400, scoped, tag = 'input window, operand 1, single buffered']
    #allocation5 [shape = 's32[1]{0}', space=sflag, size = 0x4, scoped, tag = 'scoped memory for tpu_custom_call.1']
    %7 = vsyncpa [#allocation3], 0
    %8 = vsyncpa [#allocation5], 0
    // Predicated region
    $region2: #{tpu_custom_call.1} parent=1 // pred_check
      _
    $region3: #{tpu_custom_call.1} parent=1 // pred_check_branch
      %10 = sbr.rel (0) target = $region5
    $region4: #{tpu_custom_call.1} parent=1 // pred_region
      %12 = vsyncadd [#allocation3], 0
      %s14 = sshll.u32 %s0, 4
      %s15 = int_to_ptr.hbm [resolvable:$true] %s14
      %s16 = sshll.u32 [#allocation2], 4
      %s17 = int_to_ptr.vmem [resolvable:$true] %s16
      %19 = dma.hbm_to_vmem [thread:$0]  %s15, 32, %s17, [#allocation3]
    $region5: #{tpu_custom_call.1} parent=1 // pred_fallthru
      _
    // Predicated region
    $region6: #{tpu_custom_call.1} parent=1 // pred_check
      _
    $region7: #{tpu_custom_call.1} parent=1 // pred_check_branch
      %21 = sbr.rel (0) target = $region9
    $region8: #{tpu_custom_call.1} parent=1 // pred_region
      %23 = vsyncadd [#allocation5], 0
      %s25 = sshll.u32 %s1, 4
      %s26 = int_to_ptr.hbm [resolvable:$true] %s25
      %s27 = sshll.u32 [#allocation4], 4
      %s28 = int_to_ptr.vmem [resolvable:$true] %s27
      %30 = dma.hbm_to_vmem [thread:$0]  %s26, 32, %s28, [#allocation5]
    $region9: #{tpu_custom_call.1} parent=1 // pred_fallthru
      _
    // Predicated region
    $region10: #{tpu_custom_call.1} parent=1 // pred_check
      _
    $region11: #{tpu_custom_call.1} parent=1 // pred_check_branch
      %32 = sbr.rel (0) target = $region13
    $region12: #{tpu_custom_call.1} parent=1 // pred_region
      %34 = dma.done [#allocation3], 32
    $region13: #{tpu_custom_call.1} parent=1 // pred_fallthru
      _
    // Predicated region
    $region14: #{tpu_custom_call.1} parent=1 // pred_check
      _
    $region15: #{tpu_custom_call.1} parent=1 // pred_check_branch
      %36 = sbr.rel (0) target = $region17
    $region16: #{tpu_custom_call.1} parent=1 // pred_region
      %38 = dma.done [#allocation5], 32
    $region17: #{tpu_custom_call.1} parent=1 // pred_fallthru
      _
    %v39 = vld [vmem:[#allocation2] sm:$0x3]
    %v40 = vld [vmem:[#allocation4] sm:$0x3]
    %vm41 = vcmask 25600
    %v42 = vsel %vm41, %v39, -inf
    %43 = vmax.xlane.f32.xlu0 %v42
    %v44 = vpop.xlane.xlu0 %43
    %v45 = vsub.f32 %v39, %v44
    %v46 = vmul.f32 %v45, 1.442695
    %v47 = vpow.pop %v46
    %v48 = vsel %vm41, %v47, 0.0
    %49 = vadd.xlane.f32.xlu0 %v48
    %v50 = vpop.xlane.xlu0 %49
    %v51 = vlog2.pop %v50
    %v52 = vmul.f32 %v51, 0.6931472
    %v53 = vadd.f32 %v52, %v44
    %v54 = vsub.f32 %v39, %v53
    %v55 = vsel %vm41, %v40, -inf
    %56 = vmax.xlane.f32.xlu0 %v55
    %v57 = vpop.xlane.xlu0 %56
    %v58 = vsub.f32 %v40, %v57
    %v59 = vmul.f32 %v58, 1.442695
    %v60 = vpow.pop %v59
    %v61 = vsel %vm41, %v60, 0.0
    %62 = vadd.xlane.f32.xlu0 %v61
    %v63 = vpop.xlane.xlu0 %62
    %v64 = vlog2.pop %v63
    %v65 = vmul.f32 %v64, 0.6931472
    %v66 = vadd.f32 %v65, %v57
    %v67 = vsub.f32 %v40, %v66
    %v68 = vmul.f32 %v54, 1.442695
    %v69 = vpow.pop %v68
    %v70 = vlog2.pop %v69
    %v71 = vmul.f32 %v70, 0.6931472
    %vm72 = vcmp.gt.f32.partialorder %v69, 0.0
    %v73 = vsub.f32 %v71, %v54
    %v74 = vmul.f32 %v69, %v73
    %v75 = vsel %vm72, %v74, 0.0
    %v76 = vsub.f32 %v71, %v67
    %v77 = vmul.f32 %v69, %v76
    %v78 = vsel %vm72, %v77, 0.0
    %v79 = vadd.f32 %v75, %v78
    %v80 = vsel %vm41, %v79, 0.0
    %81 = vadd.xlane.f32.xlu0 %v80
    %v82 = vpop.xlane.xlu0 %81
    %v83 = vmul.f32 %v82, 0.5
    %vm84 = vcmask 1024
    %85 = vst.msk [vmem:[%s2] sm:$0x3] %vm84, %v83
    // Predicated region
    $region18: #{tpu_custom_call.1} parent=1 // pred_check
      _
    $region19: #{tpu_custom_call.1} parent=1 // pred_check_branch
      %87 = sbr.rel (0) target = $region21
    $region20: #{tpu_custom_call.1} parent=1 // pred_region
      _
    $region21: #{tpu_custom_call.1} parent=1 // pred_fallthru
      _
    // Predicated region
    $region22: #{tpu_custom_call.1} parent=1 // pred_check
      _
    $region23: #{tpu_custom_call.1} parent=1 // pred_check_branch
      %89 = sbr.rel (0) target = $region25
    $region24: #{tpu_custom_call.1} parent=1 // pred_region
      _
    $region25: #{tpu_custom_call.1} parent=1 // pred_fallthru
      _
    %90 = vsyncpa [#allocation3], 1
    %91 = vsyncpa [#allocation5], 1

</llo_original>
